<compile_context>
chip_gen: v6e
topology: v6e:2x2x1
jax: 0.10.0
libtpu: 0.0.40
codegen_flags: <defaults>
</compile_context>

<pallas_src>
import functools

import jax
import jax.numpy as jnp
from jax.experimental import pallas as pl
from jax.experimental.pallas import tpu as pltpu


def _round_up(x, m):
    return ((x + m - 1) // m) * m


def _make_mlp_kernel(num_layers):
    """Fused kernel: refs = (x, w0, b0, w1, b1, ..., w_{L-1}, b_{L-1}, out).

    All refs are zero-padded to lane-dense shapes:
      x   : (Bt, K0_pad)
      w_i : (Ki_pad, Ni_pad)   (already transposed: x @ W + b)
      b_i : (1, Ni_pad)
      out : (Bt, N_last_pad)
    ReLU on every layer except the last; all math in f32.
    """

    def kernel(*refs):
        x_ref = refs[0]
        o_ref = refs[-1]
        wb = refs[1:-1]
        h = x_ref[...].astype(jnp.float32)
        for i in range(num_layers):
            w = wb[2 * i][...]
            b = wb[2 * i + 1][...]
            h = jnp.dot(h, w, preferred_element_type=jnp.float32) + b
            if i < num_layers - 1:
                h = jnp.maximum(h, 0.0)
        o_ref[...] = h.astype(o_ref.dtype)

    return kernel


def init_nn_params(key, input_dim, hidden_dim, hidden_num, z0_dim):
    """Deterministic init mimicking torch.nn.Linear.reset_parameters():
    weights and biases ~ U(-1/sqrt(fan_in), 1/sqrt(fan_in)).
    Returns a list of (W_transposed, bias) pairs; W_transposed has shape (in, out)."""
    dims = [input_dim] + [hidden_dim] * hidden_num + [z0_dim]
    params = []
    for i in range(len(dims) - 1):
        fan_in, fan_out = dims[i], dims[i + 1]
        key, kw, kb = jax.random.split(key, 3)
        bound = 1.0 / (fan_in ** 0.5)
        w_t = jax.random.uniform(
            kw, (fan_in, fan_out), jnp.float32, minval=-bound, maxval=bound
        )
        b = jax.random.uniform(
            kb, (fan_out,), jnp.float32, minval=-bound, maxval=bound
        )
        params.append((w_t, b))
    return params


def make_fused_forward(params, input_dim):
    """Build a jitted forward(x) that runs the whole MLP in one pallas_call.

    Weights/biases are zero-padded once (here) to lane-dense shapes; the
    returned function only pads the input batch/features and slices the real
    z0 columns from the lane-dense kernel output.
    """
    num_layers = len(params)
    dims = [int(input_dim)] + [int(w.shape[1]) for w, _ in params]
    dims_pad = [_round_up(d, 128) for d in dims]

    padded_wb = []
    for i, (w, b) in enumerate(params):
        kp, npd = dims_pad[i], dims_pad[i + 1]
        w_p = (
            jnp.zeros((kp, npd), jnp.float32)
            .at[: w.shape[0], : w.shape[1]]
            .set(w.astype(jnp.float32))
        )
        b_p = (
            jnp.zeros((1, npd), jnp.float32)
            .at[:, : b.shape[0]]
            .set(b.astype(jnp.float32))
        )
        padded_wb += [w_p, b_p]

    kernel = _make_mlp_kernel(num_layers)

    def forward(x):
        B, D = x.shape
        assert D == dims[0], f"expected input_dim={dims[0]}, got {D}"

        # Batch tiling: single step for small batches; 256-row tiles (parallel
        # grid axis -> megacore / 2-TC split on v7x) once the batch is large.
        if B <= 256:
            tile_b = _round_up(max(B, 8), 8)
            b_pad = tile_b
        else:
            tile_b = 256
            b_pad = _round_up(B, tile_b)
        grid = (b_pad // tile_b,)

        x_p = (
            jnp.zeros((b_pad, dims_pad[0]), jnp.float32)
            .at[:B, :D]
            .set(x.astype(jnp.float32))
        )

        in_specs = [pl.BlockSpec((tile_b, dims_pad[0]), lambda i: (i, 0))]
        for arr in padded_wb:
            in_specs.append(pl.BlockSpec(arr.shape, lambda i: (0, 0)))
        out_spec = pl.BlockSpec((tile_b, dims_pad[-1]), lambda i: (i, 0))

        y_p = pl.pallas_call(
            kernel,
            out_shape=jax.ShapeDtypeStruct((b_pad, dims_pad[-1]), jnp.float32),
            grid=grid,
            in_specs=in_specs,
            out_specs=out_spec,
            compiler_params=pltpu.CompilerParams(
                dimension_semantics=("parallel",),
                vmem_limit_bytes=32 * 1024 * 1024,
            ),
        )(x_p, *padded_wb)

        # Lane-dense store inside the kernel; slice the real columns out here.
        return y_p[:B, : dims[-1]]

    return jax.jit(forward)


def nn_forward_ref(params, x):
    """Pure-JAX reference (unpadded) for a correctness check."""
    for w_t, b in params[:-1]:
        x = jnp.maximum(x @ w_t + b, 0.0)
    w_t, b = params[-1]
    return x @ w_t + b


if __name__ == "__main__":
    # Small shapes consistent with the module's forward:
    batch = 8
    input_dim = 16
    hidden_dim = 32
    hidden_num = 3   # -> layers: in->h, h->h, h->h, h->z0
    z0_dim = 8

    key = jax.random.PRNGKey(0)
    key, kx = jax.random.split(key)
    x = jax.random.normal(kx, (batch, input_dim), jnp.float32)

    params = init_nn_params(key, input_dim, hidden_dim, hidden_num, z0_dim)

    fused_forward = make_fused_forward(params, input_dim)
    z0 = fused_forward(x)
    z0 = jax.block_until_ready(z0)

    z0_ref = nn_forward_ref(params, x)
    assert z0.shape == (batch, z0_dim)
    assert jnp.allclose(z0, z0_ref, atol=1e-5, rtol=1e-5), "mismatch vs reference"

    print("KERNEL_OK")
</pallas_src>

<mosaic_0001>
module attributes {stable_mosaic.version = 11 : i64} {
  func.func @kernel(%arg0: i32, %arg1: memref<8x128xf32, #tpu.memory_space<vmem>>, %arg2: memref<128x128xf32, #tpu.memory_space<vmem>>, %arg3: memref<1x128xf32, #tpu.memory_space<vmem>>, %arg4: memref<128x128xf32, #tpu.memory_space<vmem>>, %arg5: memref<1x128xf32, #tpu.memory_space<vmem>>, %arg6: memref<128x128xf32, #tpu.memory_space<vmem>>, %arg7: memref<1x128xf32, #tpu.memory_space<vmem>>, %arg8: memref<128x128xf32, #tpu.memory_space<vmem>>, %arg9: memref<1x128xf32, #tpu.memory_space<vmem>>, %arg10: memref<8x128xf32, #tpu.memory_space<vmem>>) attributes {dimension_semantics = [#tpu.dimension_semantics<parallel>], iteration_bounds = array<i64: 1>, scalar_prefetch = 0 : i64, scratch_operands = 0 : i64, tpu.core_type = #tpu.core_type<tc>, window_params = [{transform_indices = @transform_0, window_bounds = array<i64: 8, 128>}, {pipeline_mode = #tpu.pipeline_mode<synchronous>, transform_indices = @transform_1, window_bounds = array<i64: 128, 128>}, {pipeline_mode = #tpu.pipeline_mode<synchronous>, transform_indices = @transform_2, window_bounds = array<i64: 1, 128>}, {pipeline_mode = #tpu.pipeline_mode<synchronous>, transform_indices = @transform_3, window_bounds = array<i64: 128, 128>}, {pipeline_mode = #tpu.pipeline_mode<synchronous>, transform_indices = @transform_4, window_bounds = array<i64: 1, 128>}, {pipeline_mode = #tpu.pipeline_mode<synchronous>, transform_indices = @transform_5, window_bounds = array<i64: 128, 128>}, {pipeline_mode = #tpu.pipeline_mode<synchronous>, transform_indices = @transform_6, window_bounds = array<i64: 1, 128>}, {pipeline_mode = #tpu.pipeline_mode<synchronous>, transform_indices = @transform_7, window_bounds = array<i64: 128, 128>}, {pipeline_mode = #tpu.pipeline_mode<synchronous>, transform_indices = @transform_8, window_bounds = array<i64: 1, 128>}, {transform_indices = @transform_9, window_bounds = array<i64: 8, 128>}]} {
    %c0 = arith.constant 0 : index
    %c0_0 = arith.constant 0 : index
    %0 = vector.load %arg1[%c0, %c0_0] : memref<8x128xf32, #tpu.memory_space<vmem>>, vector<8x128xf32>
    %c0_1 = arith.constant 0 : index
    %c0_2 = arith.constant 0 : index
    %1 = vector.load %arg2[%c0_1, %c0_2] : memref<128x128xf32, #tpu.memory_space<vmem>>, vector<128x128xf32>
    %c0_3 = arith.constant 0 : index
    %c0_4 = arith.constant 0 : index
    %2 = vector.load %arg3[%c0_3, %c0_4] : memref<1x128xf32, #tpu.memory_space<vmem>>, vector<1x128xf32>
    %cst = arith.constant dense<0.000000e+00> : vector<8x128xf32>
    %3 = tpu.matmul %0, %1, %cst {dimension_numbers = #tpu.dot_dimension_numbers<[1], [0], [0], [1], [0, 0, 1, 1], [], []>} : vector<8x128xf32>, vector<128x128xf32>, vector<8x128xf32> -> vector<8x128xf32>
    %4 = vector.broadcast %2 : vector<1x128xf32> to vector<8x128xf32>
    %5 = arith.addf %3, %4 : vector<8x128xf32>
    %cst_5 = arith.constant 0.000000e+00 : f32
    %6 = vector.broadcast %cst_5 : f32 to vector<8x128xf32>
    %7 = arith.maximumf %5, %6 : vector<8x128xf32>
    %c0_6 = arith.constant 0 : index
    %c0_7 = arith.constant 0 : index
    %8 = vector.load %arg4[%c0_6, %c0_7] : memref<128x128xf32, #tpu.memory_space<vmem>>, vector<128x128xf32>
    %c0_8 = arith.constant 0 : index
    %c0_9 = arith.constant 0 : index
    %9 = vector.load %arg5[%c0_8, %c0_9] : memref<1x128xf32, #tpu.memory_space<vmem>>, vector<1x128xf32>
    %cst_10 = arith.constant dense<0.000000e+00> : vector<8x128xf32>
    %10 = tpu.matmul %7, %8, %cst_10 {dimension_numbers = #tpu.dot_dimension_numbers<[1], [0], [0], [1], [0, 0, 1, 1], [], []>} : vector<8x128xf32>, vector<128x128xf32>, vector<8x128xf32> -> vector<8x128xf32>
    %11 = vector.broadcast %9 : vector<1x128xf32> to vector<8x128xf32>
    %12 = arith.addf %10, %11 : vector<8x128xf32>
    %cst_11 = arith.constant 0.000000e+00 : f32
    %13 = vector.broadcast %cst_11 : f32 to vector<8x128xf32>
    %14 = arith.maximumf %12, %13 : vector<8x128xf32>
    %c0_12 = arith.constant 0 : index
    %c0_13 = arith.constant 0 : index
    %15 = vector.load %arg6[%c0_12, %c0_13] : memref<128x128xf32, #tpu.memory_space<vmem>>, vector<128x128xf32>
    %c0_14 = arith.constant 0 : index
    %c0_15 = arith.constant 0 : index
    %16 = vector.load %arg7[%c0_14, %c0_15] : memref<1x128xf32, #tpu.memory_space<vmem>>, vector<1x128xf32>
    %cst_16 = arith.constant dense<0.000000e+00> : vector<8x128xf32>
    %17 = tpu.matmul %14, %15, %cst_16 {dimension_numbers = #tpu.dot_dimension_numbers<[1], [0], [0], [1], [0, 0, 1, 1], [], []>} : vector<8x128xf32>, vector<128x128xf32>, vector<8x128xf32> -> vector<8x128xf32>
    %18 = vector.broadcast %16 : vector<1x128xf32> to vector<8x128xf32>
    %19 = arith.addf %17, %18 : vector<8x128xf32>
    %cst_17 = arith.constant 0.000000e+00 : f32
    %20 = vector.broadcast %cst_17 : f32 to vector<8x128xf32>
    %21 = arith.maximumf %19, %20 : vector<8x128xf32>
    %c0_18 = arith.constant 0 : index
    %c0_19 = arith.constant 0 : index
    %22 = vector.load %arg8[%c0_18, %c0_19] : memref<128x128xf32, #tpu.memory_space<vmem>>, vector<128x128xf32>
    %c0_20 = arith.constant 0 : index
    %c0_21 = arith.constant 0 : index
    %23 = vector.load %arg9[%c0_20, %c0_21] : memref<1x128xf32, #tpu.memory_space<vmem>>, vector<1x128xf32>
    %cst_22 = arith.constant dense<0.000000e+00> : vector<8x128xf32>
    %24 = tpu.matmul %21, %22, %cst_22 {dimension_numbers = #tpu.dot_dimension_numbers<[1], [0], [0], [1], [0, 0, 1, 1], [], []>} : vector<8x128xf32>, vector<128x128xf32>, vector<8x128xf32> -> vector<8x128xf32>
    %25 = vector.broadcast %23 : vector<1x128xf32> to vector<8x128xf32>
    %26 = arith.addf %24, %25 : vector<8x128xf32>
    %c0_23 = arith.constant 0 : index
    %c0_24 = arith.constant 0 : index
    %27 = vector.load %arg10[%c0_23, %c0_24] : memref<8x128xf32, #tpu.memory_space<vmem>>, vector<8x128xf32>
    tpu.vector_store %arg10[%c0_23, %c0_24], %26 {strides = array<i32>} : memref<8x128xf32, #tpu.memory_space<vmem>>, vector<8x128xf32>,
    return
  }
  func.func @transform_0(%arg0: i32) -> (i32, i32) {
    %c0_i32 = arith.constant 0 : i32
    %c0_i32_0 = arith.constant 0 : i32
    return %arg0, %c0_i32 : i32, i32
  }
  func.func @transform_1(%arg0: i32) -> (i32, i32) {
    %c0_i32 = arith.constant 0 : i32
    %c0_i32_0 = arith.constant 0 : i32
    %c0_i32_1 = arith.constant 0 : i32
    return %c0_i32, %c0_i32_0 : i32, i32
  }
  func.func @transform_2(%arg0: i32) -> (i32, i32) {
    %c0_i32 = arith.constant 0 : i32
    %c0_i32_0 = arith.constant 0 : i32
    %c0_i32_1 = arith.constant 0 : i32
    return %c0_i32, %c0_i32_0 : i32, i32
  }
  func.func @transform_3(%arg0: i32) -> (i32, i32) {
    %c0_i32 = arith.constant 0 : i32
    %c0_i32_0 = arith.constant 0 : i32
    %c0_i32_1 = arith.constant 0 : i32
    return %c0_i32, %c0_i32_0 : i32, i32
  }
  func.func @transform_4(%arg0: i32) -> (i32, i32) {
    %c0_i32 = arith.constant 0 : i32
    %c0_i32_0 = arith.constant 0 : i32
    %c0_i32_1 = arith.constant 0 : i32
    return %c0_i32, %c0_i32_0 : i32, i32
  }
  func.func @transform_5(%arg0: i32) -> (i32, i32) {
    %c0_i32 = arith.constant 0 : i32
    %c0_i32_0 = arith.constant 0 : i32
    %c0_i32_1 = arith.constant 0 : i32
    return %c0_i32, %c0_i32_0 : i32, i32
  }
  func.func @transform_6(%arg0: i32) -> (i32, i32) {
    %c0_i32 = arith.constant 0 : i32
    %c0_i32_0 = arith.constant 0 : i32
    %c0_i32_1 = arith.constant 0 : i32
    return %c0_i32, %c0_i32_0 : i32, i32
  }
  func.func @transform_7(%arg0: i32) -> (i32, i32) {
    %c0_i32 = arith.constant 0 : i32
    %c0_i32_0 = arith.constant 0 : i32
    %c0_i32_1 = arith.constant 0 : i32
    return %c0_i32, %c0_i32_0 : i32, i32
  }
  func.func @transform_8(%arg0: i32) -> (i32, i32) {
    %c0_i32 = arith.constant 0 : i32
    %c0_i32_0 = arith.constant 0 : i32
    %c0_i32_1 = arith.constant 0 : i32
    return %c0_i32, %c0_i32_0 : i32, i32
  }
  func.func @transform_9(%arg0: i32) -> (i32, i32) {
    %c0_i32 = arith.constant 0 : i32
    %c0_i32_0 = arith.constant 0 : i32
    return %arg0, %c0_i32 : i32, i32
  }
}

</mosaic_0001>

<llo_original>
// kernel: forward.1
$region0: #{forward.1}
  #allocation0 [shape = 'u32[]', space=smem, size = 0x4, offset = 0x4, fixed_abs, tag = 'smem constant byte address 0x4 - core index']
  #allocation1 [shape = 'u32[144,128]{1,0:T(1,128)}', space=vmem, size = 0x12000, scoped, tag = 'internal scratch']
  %s0 = inlined_call_operand.vmem [shape: f32[8,128], index: 0, kind: input, shape index: {}]
  %s1 = inlined_call_operand.hbm [shape: f32[128,128], index: 1, kind: input, shape index: {}]
  %s2 = inlined_call_operand.vmem [shape: f32[1,128], index: 2, kind: input, shape index: {}]
  %s3 = inlined_call_operand.hbm [shape: f32[128,128], index: 3, kind: input, shape index: {}]
  %s4 = inlined_call_operand.vmem [shape: f32[1,128], index: 4, kind: input, shape index: {}]
  %s5 = inlined_call_operand.hbm [shape: f32[128,128], index: 5, kind: input, shape index: {}]
  %s6 = inlined_call_operand.vmem [shape: f32[1,128], index: 6, kind: input, shape index: {}]
  %s7 = inlined_call_operand.hbm [shape: f32[128,128], index: 7, kind: input, shape index: {}]
  %s8 = inlined_call_operand.vmem [shape: f32[1,128], index: 8, kind: input, shape index: {}]
  %s9 = inlined_call_operand.hbm [shape: f32[8,128], index: 9, kind: output, shape index: {}]
  %s10 = sld [smem:[#allocation0]]
  $region62: #{forward.1} parent=0
    _
  %s12 = ssub.s32 1, %s10
  %s13 = scalar_select 0, %s12, %s10
  $region1: #{forward.1} parent=0
    #allocation2 [shape = 'u8[65536]{0}', space=vmem, size = 0x10000, scoped, tag = 'input window, operand 1, single buffered']
    #allocation3 [shape = 's32[1]{0}', space=sflag, size = 0x4, scoped, tag = 'scoped memory for forward.1']
    #allocation4 [shape = 's32[1]{0}', space=sflag, size = 0x4, scoped, tag = 'scoped memory for forward.1']
    #allocation5 [shape = 'u8[65536]{0}', space=vmem, size = 0x10000, scoped, tag = 'input window, operand 3, single buffered']
    #allocation6 [shape = 's32[1]{0}', space=sflag, size = 0x4, scoped, tag = 'scoped memory for forward.1']
    #allocation7 [shape = 'u8[65536]{0}', space=vmem, size = 0x10000, scoped, tag = 'input window, operand 5, single buffered']
    #allocation8 [shape = 'u8[65536]{0}', space=vmem, size = 0x10000, scoped, tag = 'input window, operand 7, single buffered']
    #allocation9 [shape = 's32[1]{0}', space=sflag, size = 0x4, scoped, tag = 'scoped memory for forward.1']
    #allocation10 [shape = 'u8[4096]{0}', space=vmem, size = 0x1000, scoped, tag = 'output window, operand 0, single buffered']
    %14 = vsyncpa [#allocation3], 0
    %15 = vsyncpa [#allocation6], 0
    %16 = vsyncpa [#allocation9], 0
    %17 = vsyncpa [#allocation4], 0
    // Predicated region
    $region2: #{forward.1} parent=1 // pred_check
      _
    $region3: #{forward.1} parent=1 // pred_check_branch
      %19 = sbr.rel (0) target = $region5
    $region4: #{forward.1} parent=1 // pred_region
      _
    $region5: #{forward.1} parent=1 // pred_fallthru
      _
    // Predicated region
    $region6: #{forward.1} parent=1 // pred_check
      _
    $region7: #{forward.1} parent=1 // pred_check_branch
      %21 = sbr.rel (0) target = $region9
    $region8: #{forward.1} parent=1 // pred_region
      %s23 = ssub.s32 2048, 2048
      %24 = vsyncadd [#allocation3], %s23
      %s25 = sshll.u32 [#allocation2], 4
      %s26 = int_to_ptr.vmem [resolvable:$true] %s25
      %31 = dma.hbm_to_vmem [thread:$0]  %s1, 2048, %s26, [#allocation3], 128, 128, 8
    $region9: #{forward.1} parent=1 // pred_fallthru
      _
    // Predicated region
    $region10: #{forward.1} parent=1 // pred_check
      _
    $region11: #{forward.1} parent=1 // pred_check_branch
      %33 = sbr.rel (0) target = $region13
    $region12: #{forward.1} parent=1 // pred_region
      _
    $region13: #{forward.1} parent=1 // pred_fallthru
      _
    // Predicated region
    $region14: #{forward.1} parent=1 // pred_check
      _
    $region15: #{forward.1} parent=1 // pred_check_branch
      %35 = sbr.rel (0) target = $region17
    $region16: #{forward.1} parent=1 // pred_region
      %s37 = ssub.s32 2048, 2048
      %38 = vsyncadd [#allocation6], %s37
      %s39 = sshll.u32 [#allocation5], 4
      %s40 = int_to_ptr.vmem [resolvable:$true] %s39
      %45 = dma.hbm_to_vmem [thread:$0]  %s3, 2048, %s40, [#allocation6], 128, 128, 8
    $region17: #{forward.1} parent=1 // pred_fallthru
      _
    // Predicated region
    $region18: #{forward.1} parent=1 // pred_check
      _
    $region19: #{forward.1} parent=1 // pred_check_branch
      %47 = sbr.rel (0) target = $region21
    $region20: #{forward.1} parent=1 // pred_region
      _
    $region21: #{forward.1} parent=1 // pred_fallthru
      _
    // Predicated region
    $region22: #{forward.1} parent=1 // pred_check
      _
    $region23: #{forward.1} parent=1 // pred_check_branch
      %49 = sbr.rel (0) target = $region25
    $region24: #{forward.1} parent=1 // pred_region
      %s51 = ssub.s32 2048, 2048
      %52 = vsyncadd [#allocation6], %s51
      %s53 = sshll.u32 [#allocation7], 4
      %s54 = int_to_ptr.vmem [resolvable:$true] %s53
      %59 = dma.hbm_to_vmem [thread:$0]  %s5, 2048, %s54, [#allocation6], 128, 128, 8
    $region25: #{forward.1} parent=1 // pred_fallthru
      _
    // Predicated region
    $region26: #{forward.1} parent=1 // pred_check
      _
    $region27: #{forward.1} parent=1 // pred_check_branch
      %61 = sbr.rel (0) target = $region29
    $region28: #{forward.1} parent=1 // pred_region
      _
    $region29: #{forward.1} parent=1 // pred_fallthru
      _
    // Predicated region
    $region30: #{forward.1} parent=1 // pred_check
      _
    $region31: #{forward.1} parent=1 // pred_check_branch
      %63 = sbr.rel (0) target = $region33
    $region32: #{forward.1} parent=1 // pred_region
      %s65 = ssub.s32 2048, 2048
      %66 = vsyncadd [#allocation9], %s65
      %s67 = sshll.u32 [#allocation8], 4
      %s68 = int_to_ptr.vmem [resolvable:$true] %s67
      %73 = dma.hbm_to_vmem [thread:$0]  %s7, 2048, %s68, [#allocation9], 128, 128, 8
    $region33: #{forward.1} parent=1 // pred_fallthru
      _
    // Predicated region
    $region34: #{forward.1} parent=1 // pred_check
      _
    $region35: #{forward.1} parent=1 // pred_check_branch
      %75 = sbr.rel (0) target = $region37
    $region36: #{forward.1} parent=1 // pred_region
      _
    $region37: #{forward.1} parent=1 // pred_fallthru
      _
    // Predicated region
    $region38: #{forward.1} parent=1 // pred_check
      _
    $region39: #{forward.1} parent=1 // pred_check_branch
      %77 = sbr.rel (0) target = $region41
    $region40: #{forward.1} parent=1 // pred_region
      %78 = dma.done [#allocation3], 2048
    $region41: #{forward.1} parent=1 // pred_fallthru
      _
    // Predicated region
    $region42: #{forward.1} parent=1 // pred_check
      _
    $region43: #{forward.1} parent=1 // pred_check_branch
      %80 = sbr.rel (0) target = $region45
    $region44: #{forward.1} parent=1 // pred_region
      %81 = dma.done [#allocation6], 2048
    $region45: #{forward.1} parent=1 // pred_fallthru
      _
    // Predicated region
    $region46: #{forward.1} parent=1 // pred_check
      _
    $region47: #{forward.1} parent=1 // pred_check_branch
      %83 = sbr.rel (0) target = $region49
    $region48: #{forward.1} parent=1 // pred_region
      %84 = dma.done [#allocation6], 2048
    $region49: #{forward.1} parent=1 // pred_fallthru
      _
    // Predicated region
    $region50: #{forward.1} parent=1 // pred_check
      _
    $region51: #{forward.1} parent=1 // pred_check_branch
      %86 = sbr.rel (0) target = $region53
    $region52: #{forward.1} parent=1 // pred_region
      %87 = dma.done [#allocation9], 2048
    $region53: #{forward.1} parent=1 // pred_fallthru
      _
    %v88 = vld [vmem:[%s0] sm:$0xff]
    %v89 = vld [vmem:[#allocation2] sm:$0xff]
    %v90 = vld [vmem:[#allocation2 + $0x8] sm:$0xff]
    %v91 = vld [vmem:[#allocation2 + $0x10] sm:$0xff]
    %v92 = vld [vmem:[#allocation2 + $0x18] sm:$0xff]
    %v93 = vld [vmem:[#allocation2 + $0x20] sm:$0xff]
    %v94 = vld [vmem:[#allocation2 + $0x28] sm:$0xff]
    %v95 = vld [vmem:[#allocation2 + $0x30] sm:$0xff]
    %v96 = vld [vmem:[#allocation2 + $0x38] sm:$0xff]
    %v97 = vld [vmem:[#allocation2 + $0x40] sm:$0xff]
    %v98 = vld [vmem:[#allocation2 + $0x48] sm:$0xff]
    %v99 = vld [vmem:[#allocation2 + $0x50] sm:$0xff]
    %v100 = vld [vmem:[#allocation2 + $0x58] sm:$0xff]
    %v101 = vld [vmem:[#allocation2 + $0x60] sm:$0xff]
    %v102 = vld [vmem:[#allocation2 + $0x68] sm:$0xff]
    %v103 = vld [vmem:[#allocation2 + $0x70] sm:$0xff]
    %v104 = vld [vmem:[#allocation2 + $0x78] sm:$0xff]
    %v105 = vld [vmem:[%s2] sm:$0x1]
    %v107 = vlaneseq
    %v108 = vshrl.u32 %v107, 7
    %v109 = vsub.s32 0, %v108
    %v110 = vrot.slane %v105, %v109
    %112 = vmatprep.subr.mxu0 0.0
    %113 = vmatpush1.msra.mxu0 %v104
    %114 = vmatprep.subr.mxu0 0.0
    %115 = vmatpush1.msra.mxu0 %v103
    %116 = vmatprep.subr.mxu0 0.0
    %117 = vmatpush1.msra.mxu0 %v102
    %118 = vmatprep.subr.mxu0 0.0
    %119 = vmatpush1.msra.mxu0 %v101
    %120 = vmatprep.subr.mxu0 0.0
    %121 = vmatpush1.msra.mxu0 %v100
    %122 = vmatprep.subr.mxu0 0.0
    %123 = vmatpush1.msra.mxu0 %v99
    %124 = vmatprep.subr.mxu0 0.0
    %125 = vmatpush1.msra.mxu0 %v98
    %126 = vmatprep.subr.mxu0 0.0
    %127 = vmatpush1.msra.mxu0 %v97
    %128 = vmatprep.subr.mxu0 0.0
    %129 = vmatpush1.msra.mxu0 %v96
    %130 = vmatprep.subr.mxu0 0.0
    %131 = vmatpush1.msra.mxu0 %v95
    %132 = vmatprep.subr.mxu0 0.0
    %133 = vmatpush1.msra.mxu0 %v94
    %134 = vmatprep.subr.mxu0 0.0
    %135 = vmatpush1.msra.mxu0 %v93
    %136 = vmatprep.subr.mxu0 0.0
    %137 = vmatpush1.msra.mxu0 %v92
    %138 = vmatprep.subr.mxu0 0.0
    %139 = vmatpush1.msra.mxu0 %v91
    %140 = vmatprep.subr.mxu0 0.0
    %141 = vmatpush1.msra.mxu0 %v90
    %142 = vmatprep.subr.mxu0 0.0
    %143 = vmatpush1.msra.mxu0 %v89
    %144 = vmatprep.subr.mxu0 0.0
    %145 = vmatpush2.msra.mxu0 0.0
    %146 = vmatprep.subr.mxu0 0.0
    %147 = vmatpush2.msra.mxu0 0.0
    %148 = vmatprep.subr.mxu0 0.0
    %149 = vmatpush2.msra.mxu0 0.0
    %150 = vmatprep.subr.mxu0 0.0
    %151 = vmatpush2.msra.mxu0 0.0
    %152 = vmatprep.subr.mxu0 0.0
    %153 = vmatpush2.msra.mxu0 0.0
    %154 = vmatprep.subr.mxu0 0.0
    %155 = vmatpush2.msra.mxu0 0.0
    %156 = vmatprep.subr.mxu0 0.0
    %157 = vmatpush2.msra.mxu0 0.0
    %158 = vmatprep.subr.mxu0 0.0
    %159 = vmatpush2.msra.mxu0 0.0
    %160 = vmatprep.subr.mxu0 0.0
    %161 = vmatpush2.msra.mxu0 0.0
    %162 = vmatprep.subr.mxu0 0.0
    %163 = vmatpush2.msra.mxu0 0.0
    %164 = vmatprep.subr.mxu0 0.0
    %165 = vmatpush2.msra.mxu0 0.0
    %166 = vmatprep.subr.mxu0 0.0
    %167 = vmatpush2.msra.mxu0 0.0
    %168 = vmatprep.subr.mxu0 0.0
    %169 = vmatpush2.msra.mxu0 0.0
    %170 = vmatprep.subr.mxu0 0.0
    %171 = vmatpush2.msra.mxu0 0.0
    %172 = vmatprep.subr.mxu0 0.0
    %173 = vmatpush2.msra.mxu0 0.0
    %174 = vmatprep.subr.mxu0 0.0
    %175 = vmatpush2.msra.mxu0 0.0
    %176 = vmatprep.mubr.f32.mxu0 0.0
    %177 = vmatmul.mubr.f32.gmra.mxu0 %v88
    %v178 = vpop.f32.mrf.mxu0
    %v179 = vadd.f32 %v110, %v178
    %v180 = vpop.f32.mrf.mxu0
    %181 = vdwg.mxu0
    %v182 = vmax.f32 %v179, 0.0
    %v183 = vld [vmem:[#allocation5] sm:$0xff]
    %v184 = vld [vmem:[#allocation5 + $0x8] sm:$0xff]
    %v185 = vld [vmem:[#allocation5 + $0x10] sm:$0xff]
    %v186 = vld [vmem:[#allocation5 + $0x18] sm:$0xff]
    %v187 = vld [vmem:[#allocation5 + $0x20] sm:$0xff]
    %v188 = vld [vmem:[#allocation5 + $0x28] sm:$0xff]
    %v189 = vld [vmem:[#allocation5 + $0x30] sm:$0xff]
    %v190 = vld [vmem:[#allocation5 + $0x38] sm:$0xff]
    %v191 = vld [vmem:[#allocation5 + $0x40] sm:$0xff]
    %v192 = vld [vmem:[#allocation5 + $0x48] sm:$0xff]
    %v193 = vld [vmem:[#allocation5 + $0x50] sm:$0xff]
    %v194 = vld [vmem:[#allocation5 + $0x58] sm:$0xff]
    %v195 = vld [vmem:[#allocation5 + $0x60] sm:$0xff]
    %v196 = vld [vmem:[#allocation5 + $0x68] sm:$0xff]
    %v197 = vld [vmem:[#allocation5 + $0x70] sm:$0xff]
    %v198 = vld [vmem:[#allocation5 + $0x78] sm:$0xff]
    %v199 = vld [vmem:[%s4] sm:$0x1]
    %v201 = vlaneseq
    %v202 = vshrl.u32 %v201, 7
    %v203 = vsub.s32 0, %v202
    %v204 = vrot.slane %v199, %v203
    %206 = vmatprep.subr.mxu0 0.0
    %207 = vmatpush1.msra.mxu0 %v198
    %208 = vmatprep.subr.mxu0 0.0
    %209 = vmatpush1.msra.mxu0 %v197
    %210 = vmatprep.subr.mxu0 0.0
    %211 = vmatpush1.msra.mxu0 %v196
    %212 = vmatprep.subr.mxu0 0.0
    %213 = vmatpush1.msra.mxu0 %v195
    %214 = vmatprep.subr.mxu0 0.0
    %215 = vmatpush1.msra.mxu0 %v194
    %216 = vmatprep.subr.mxu0 0.0
    %217 = vmatpush1.msra.mxu0 %v193
    %218 = vmatprep.subr.mxu0 0.0
    %219 = vmatpush1.msra.mxu0 %v192
    %220 = vmatprep.subr.mxu0 0.0
    %221 = vmatpush1.msra.mxu0 %v191
    %222 = vmatprep.subr.mxu0 0.0
    %223 = vmatpush1.msra.mxu0 %v190
    %224 = vmatprep.subr.mxu0 0.0
    %225 = vmatpush1.msra.mxu0 %v189
    %226 = vmatprep.subr.mxu0 0.0
    %227 = vmatpush1.msra.mxu0 %v188
    %228 = vmatprep.subr.mxu0 0.0
    %229 = vmatpush1.msra.mxu0 %v187
    %230 = vmatprep.subr.mxu0 0.0
    %231 = vmatpush1.msra.mxu0 %v186
    %232 = vmatprep.subr.mxu0 0.0
    %233 = vmatpush1.msra.mxu0 %v185
    %234 = vmatprep.subr.mxu0 0.0
    %235 = vmatpush1.msra.mxu0 %v184
    %236 = vmatprep.subr.mxu0 0.0
    %237 = vmatpush1.msra.mxu0 %v183
    %238 = vmatprep.subr.mxu0 0.0
    %239 = vmatpush2.msra.mxu0 0.0
    %240 = vmatprep.subr.mxu0 0.0
    %241 = vmatpush2.msra.mxu0 0.0
    %242 = vmatprep.subr.mxu0 0.0
    %243 = vmatpush2.msra.mxu0 0.0
    %244 = vmatprep.subr.mxu0 0.0
    %245 = vmatpush2.msra.mxu0 0.0
    %246 = vmatprep.subr.mxu0 0.0
    %247 = vmatpush2.msra.mxu0 0.0
    %248 = vmatprep.subr.mxu0 0.0
    %249 = vmatpush2.msra.mxu0 0.0
    %250 = vmatprep.subr.mxu0 0.0
    %251 = vmatpush2.msra.mxu0 0.0
    %252 = vmatprep.subr.mxu0 0.0
    %253 = vmatpush2.msra.mxu0 0.0
    %254 = vmatprep.subr.mxu0 0.0
    %255 = vmatpush2.msra.mxu0 0.0
    %256 = vmatprep.subr.mxu0 0.0
    %257 = vmatpush2.msra.mxu0 0.0
    %258 = vmatprep.subr.mxu0 0.0
    %259 = vmatpush2.msra.mxu0 0.0
    %260 = vmatprep.subr.mxu0 0.0
    %261 = vmatpush2.msra.mxu0 0.0
    %262 = vmatprep.subr.mxu0 0.0
    %263 = vmatpush2.msra.mxu0 0.0
    %264 = vmatprep.subr.mxu0 0.0
    %265 = vmatpush2.msra.mxu0 0.0
    %266 = vmatprep.subr.mxu0 0.0
    %267 = vmatpush2.msra.mxu0 0.0
    %268 = vmatprep.subr.mxu0 0.0
    %269 = vmatpush2.msra.mxu0 0.0
    %270 = vmatprep.mubr.f32.mxu0 0.0
    %271 = vmatmul.mubr.f32.gmra.mxu0 %v182
    %v272 = vpop.f32.mrf.mxu0
    %v273 = vadd.f32 %v204, %v272
    %v274 = vpop.f32.mrf.mxu0
    %275 = vdwg.mxu0
    %v276 = vmax.f32 %v273, 0.0
    %v277 = vld [vmem:[#allocation7] sm:$0xff]
    %v278 = vld [vmem:[#allocation7 + $0x8] sm:$0xff]
    %v279 = vld [vmem:[#allocation7 + $0x10] sm:$0xff]
    %v280 = vld [vmem:[#allocation7 + $0x18] sm:$0xff]
    %v281 = vld [vmem:[#allocation7 + $0x20] sm:$0xff]
    %v282 = vld [vmem:[#allocation7 + $0x28] sm:$0xff]
    %v283 = vld [vmem:[#allocation7 + $0x30] sm:$0xff]
    %v284 = vld [vmem:[#allocation7 + $0x38] sm:$0xff]
    %v285 = vld [vmem:[#allocation7 + $0x40] sm:$0xff]
    %v286 = vld [vmem:[#allocation7 + $0x48] sm:$0xff]
    %v287 = vld [vmem:[#allocation7 + $0x50] sm:$0xff]
    %v288 = vld [vmem:[#allocation7 + $0x58] sm:$0xff]
    %v289 = vld [vmem:[#allocation7 + $0x60] sm:$0xff]
    %v290 = vld [vmem:[#allocation7 + $0x68] sm:$0xff]
    %v291 = vld [vmem:[#allocation7 + $0x70] sm:$0xff]
    %v292 = vld [vmem:[#allocation7 + $0x78] sm:$0xff]
    %v293 = vld [vmem:[%s6] sm:$0x1]
    %v295 = vlaneseq
    %v296 = vshrl.u32 %v295, 7
    %v297 = vsub.s32 0, %v296
    %v298 = vrot.slane %v293, %v297
    %300 = vmatprep.subr.mxu0 0.0
    %301 = vmatpush1.msra.mxu0 %v292
    %302 = vmatprep.subr.mxu0 0.0
    %303 = vmatpush1.msra.mxu0 %v291
    %304 = vmatprep.subr.mxu0 0.0
    %305 = vmatpush1.msra.mxu0 %v290
    %306 = vmatprep.subr.mxu0 0.0
    %307 = vmatpush1.msra.mxu0 %v289
    %308 = vmatprep.subr.mxu0 0.0
    %309 = vmatpush1.msra.mxu0 %v288
    %310 = vmatprep.subr.mxu0 0.0
    %311 = vmatpush1.msra.mxu0 %v287
    %312 = vmatprep.subr.mxu0 0.0
    %313 = vmatpush1.msra.mxu0 %v286
    %314 = vmatprep.subr.mxu0 0.0
    %315 = vmatpush1.msra.mxu0 %v285
    %316 = vmatprep.subr.mxu0 0.0
    %317 = vmatpush1.msra.mxu0 %v284
    %318 = vmatprep.subr.mxu0 0.0
    %319 = vmatpush1.msra.mxu0 %v283
    %320 = vmatprep.subr.mxu0 0.0
    %321 = vmatpush1.msra.mxu0 %v282
    %322 = vmatprep.subr.mxu0 0.0
    %323 = vmatpush1.msra.mxu0 %v281
    %324 = vmatprep.subr.mxu0 0.0
    %325 = vmatpush1.msra.mxu0 %v280
    %326 = vmatprep.subr.mxu0 0.0
    %327 = vmatpush1.msra.mxu0 %v279
    %328 = vmatprep.subr.mxu0 0.0
    %329 = vmatpush1.msra.mxu0 %v278
    %330 = vmatprep.subr.mxu0 0.0
    %331 = vmatpush1.msra.mxu0 %v277
    %332 = vmatprep.subr.mxu0 0.0
    %333 = vmatpush2.msra.mxu0 0.0
    %334 = vmatprep.subr.mxu0 0.0
    %335 = vmatpush2.msra.mxu0 0.0
    %336 = vmatprep.subr.mxu0 0.0
    %337 = vmatpush2.msra.mxu0 0.0
    %338 = vmatprep.subr.mxu0 0.0
    %339 = vmatpush2.msra.mxu0 0.0
    %340 = vmatprep.subr.mxu0 0.0
    %341 = vmatpush2.msra.mxu0 0.0
    %342 = vmatprep.subr.mxu0 0.0
    %343 = vmatpush2.msra.mxu0 0.0
    %344 = vmatprep.subr.mxu0 0.0
    %345 = vmatpush2.msra.mxu0 0.0
    %346 = vmatprep.subr.mxu0 0.0
    %347 = vmatpush2.msra.mxu0 0.0
    %348 = vmatprep.subr.mxu0 0.0
    %349 = vmatpush2.msra.mxu0 0.0
    %350 = vmatprep.subr.mxu0 0.0
    %351 = vmatpush2.msra.mxu0 0.0
    %352 = vmatprep.subr.mxu0 0.0
    %353 = vmatpush2.msra.mxu0 0.0
    %354 = vmatprep.subr.mxu0 0.0
    %355 = vmatpush2.msra.mxu0 0.0
    %356 = vmatprep.subr.mxu0 0.0
    %357 = vmatpush2.msra.mxu0 0.0
    %358 = vmatprep.subr.mxu0 0.0
    %359 = vmatpush2.msra.mxu0 0.0
    %360 = vmatprep.subr.mxu0 0.0
    %361 = vmatpush2.msra.mxu0 0.0
    %362 = vmatprep.subr.mxu0 0.0
    %363 = vmatpush2.msra.mxu0 0.0
    %364 = vmatprep.mubr.f32.mxu0 0.0
    %365 = vmatmul.mubr.f32.gmra.mxu0 %v276
    %v366 = vpop.f32.mrf.mxu0
    %v367 = vadd.f32 %v298, %v366
    %v368 = vpop.f32.mrf.mxu0
    %369 = vdwg.mxu0
    %v370 = vmax.f32 %v367, 0.0
    %v371 = vld [vmem:[#allocation8] sm:$0xff]
    %v372 = vld [vmem:[#allocation8 + $0x8] sm:$0xff]
    %v373 = vld [vmem:[#allocation8 + $0x10] sm:$0xff]
    %v374 = vld [vmem:[#allocation8 + $0x18] sm:$0xff]
    %v375 = vld [vmem:[#allocation8 + $0x20] sm:$0xff]
    %v376 = vld [vmem:[#allocation8 + $0x28] sm:$0xff]
    %v377 = vld [vmem:[#allocation8 + $0x30] sm:$0xff]
    %v378 = vld [vmem:[#allocation8 + $0x38] sm:$0xff]
    %v379 = vld [vmem:[#allocation8 + $0x40] sm:$0xff]
    %v380 = vld [vmem:[#allocation8 + $0x48] sm:$0xff]
    %v381 = vld [vmem:[#allocation8 + $0x50] sm:$0xff]
    %v382 = vld [vmem:[#allocation8 + $0x58] sm:$0xff]
    %v383 = vld [vmem:[#allocation8 + $0x60] sm:$0xff]
    %v384 = vld [vmem:[#allocation8 + $0x68] sm:$0xff]
    %v385 = vld [vmem:[#allocation8 + $0x70] sm:$0xff]
    %v386 = vld [vmem:[#allocation8 + $0x78] sm:$0xff]
    %v387 = vld [vmem:[%s8] sm:$0x1]
    %v389 = vlaneseq
    %v390 = vshrl.u32 %v389, 7
    %v391 = vsub.s32 0, %v390
    %v392 = vrot.slane %v387, %v391
    %394 = vmatprep.subr.mxu0 0.0
    %395 = vmatpush1.msra.mxu0 %v386
    %396 = vmatprep.subr.mxu0 0.0
    %397 = vmatpush1.msra.mxu0 %v385
    %398 = vmatprep.subr.mxu0 0.0
    %399 = vmatpush1.msra.mxu0 %v384
    %400 = vmatprep.subr.mxu0 0.0
    %401 = vmatpush1.msra.mxu0 %v383
    %402 = vmatprep.subr.mxu0 0.0
    %403 = vmatpush1.msra.mxu0 %v382
    %404 = vmatprep.subr.mxu0 0.0
    %405 = vmatpush1.msra.mxu0 %v381
    %406 = vmatprep.subr.mxu0 0.0
    %407 = vmatpush1.msra.mxu0 %v380
    %408 = vmatprep.subr.mxu0 0.0
    %409 = vmatpush1.msra.mxu0 %v379
    %410 = vmatprep.subr.mxu0 0.0
    %411 = vmatpush1.msra.mxu0 %v378
    %412 = vmatprep.subr.mxu0 0.0
    %413 = vmatpush1.msra.mxu0 %v377
    %414 = vmatprep.subr.mxu0 0.0
    %415 = vmatpush1.msra.mxu0 %v376
    %416 = vmatprep.subr.mxu0 0.0
    %417 = vmatpush1.msra.mxu0 %v375
    %418 = vmatprep.subr.mxu0 0.0
    %419 = vmatpush1.msra.mxu0 %v374
    %420 = vmatprep.subr.mxu0 0.0
    %421 = vmatpush1.msra.mxu0 %v373
    %422 = vmatprep.subr.mxu0 0.0
    %423 = vmatpush1.msra.mxu0 %v372
    %424 = vmatprep.subr.mxu0 0.0
    %425 = vmatpush1.msra.mxu0 %v371
    %426 = vmatprep.subr.mxu0 0.0
    %427 = vmatpush2.msra.mxu0 0.0
    %428 = vmatprep.subr.mxu0 0.0
    %429 = vmatpush2.msra.mxu0 0.0
    %430 = vmatprep.subr.mxu0 0.0
    %431 = vmatpush2.msra.mxu0 0.0
    %432 = vmatprep.subr.mxu0 0.0
    %433 = vmatpush2.msra.mxu0 0.0
    %434 = vmatprep.subr.mxu0 0.0
    %435 = vmatpush2.msra.mxu0 0.0
    %436 = vmatprep.subr.mxu0 0.0
    %437 = vmatpush2.msra.mxu0 0.0
    %438 = vmatprep.subr.mxu0 0.0
    %439 = vmatpush2.msra.mxu0 0.0
    %440 = vmatprep.subr.mxu0 0.0
    %441 = vmatpush2.msra.mxu0 0.0
    %442 = vmatprep.subr.mxu0 0.0
    %443 = vmatpush2.msra.mxu0 0.0
    %444 = vmatprep.subr.mxu0 0.0
    %445 = vmatpush2.msra.mxu0 0.0
    %446 = vmatprep.subr.mxu0 0.0
    %447 = vmatpush2.msra.mxu0 0.0
    %448 = vmatprep.subr.mxu0 0.0
    %449 = vmatpush2.msra.mxu0 0.0
    %450 = vmatprep.subr.mxu0 0.0
    %451 = vmatpush2.msra.mxu0 0.0
    %452 = vmatprep.subr.mxu0 0.0
    %453 = vmatpush2.msra.mxu0 0.0
    %454 = vmatprep.subr.mxu0 0.0
    %455 = vmatpush2.msra.mxu0 0.0
    %456 = vmatprep.subr.mxu0 0.0
    %457 = vmatpush2.msra.mxu0 0.0
    %458 = vmatprep.mubr.f32.mxu0 0.0
    %459 = vmatmul.mubr.f32.gmra.mxu0 %v370
    %v460 = vpop.f32.mrf.mxu0
    %v461 = vadd.f32 %v392, %v460
    %v462 = vpop.f32.mrf.mxu0
    %463 = vdwg.mxu0
    %464 = vst [vmem:[#allocation10] sm:$0xff] %v461
    // Predicated region
    $region54: #{forward.1} parent=1 // pred_check
      _
    $region55: #{forward.1} parent=1 // pred_check_branch
      %466 = sbr.rel (0) target = $region57
    $region56: #{forward.1} parent=1 // pred_region
      %s468 = ssub.s32 128, 128
      %469 = vsyncadd [#allocation4], %s468
      %s471 = sshll.u32 [#allocation10], 4
      %s472 = int_to_ptr.vmem [resolvable:$true] %s471
      %474 = dma.vmem_to_hbm [thread:$0]  %s472, 128, %s9, [#allocation4]
    $region57: #{forward.1} parent=1 // pred_fallthru
      _
    // Predicated region
    $region58: #{forward.1} parent=1 // pred_check
      _
    $region59: #{forward.1} parent=1 // pred_check_branch
      %476 = sbr.rel (0) target = $region61
    $region60: #{forward.1} parent=1 // pred_region
      %477 = dma.done [#allocation4], 128
    $region61: #{forward.1} parent=1 // pred_fallthru
      _
    %478 = vsyncpa [#allocation3], 1
    %479 = vsyncpa [#allocation6], 1
    %480 = vsyncpa [#allocation9], 1
    %481 = vsyncpa [#allocation4], 1

</llo_original>
